<compile_context>
chip_gen: v6e
topology: v6e:2x2x1
jax: 0.10.0
libtpu: 0.0.40
codegen_flags: <defaults>
</compile_context>

<pallas_src>
import functools

import jax
import jax.numpy as jnp
import numpy as np
from jax.experimental import pallas as pl
from jax.experimental.pallas import tpu as pltpu

LANE = 128                      # TPU lane width
_ROW_BYTES = LANE * 4           # one f32 row of 128 lanes


# ----------------------------------------------------------------------------
# Hardware / tiling helpers
# ----------------------------------------------------------------------------
def _vmem_capacity_bytes():
    """Physical VMEM per core; conservative 64 MiB (v7x) fallback."""
    try:
        info = pltpu.get_tpu_info()
        for name in ("vmem_capacity_bytes", "vmem_bytes", "vmem_size_bytes"):
            v = getattr(info, name, None)
            if v:
                return int(min(max(int(v), 64 << 20), 128 << 20))
    except Exception:
        pass
    return 64 << 20


def _vmem_limit(footprint, cap):
    """Scoped-VMEM limit: footprint + margin, capped below physical VMEM."""
    return int(min(cap * 3 // 4, max(32 << 20, footprint + footprint // 4 + (4 << 20))))


def _block_rows(r, c, max_block_bytes, cap_rows):
    """Rows of 128 lanes per block: full extent if small, else a multiple of 8."""
    max_rows = max(8, min(cap_rows, (max_block_bytes // (c * _ROW_BYTES)) // 8 * 8))
    if r <= max_rows:
        return r, r                      # (BR, R_pad): full-extent block
    br = max_rows
    return br, -(-r // br) * br


# ----------------------------------------------------------------------------
# Fused single-pass kernel (phase 0: conv+ReLU+stats into VMEM, phase 1: BN)
# ----------------------------------------------------------------------------
def _fused_kernel(w_ref, gb_ref, x_ref, o_ref, y_vmem, stats_vmem, ss_vmem,
                  *, n_chan, n_batch, n_hw, inv_count, eps):
    p = pl.program_id(0)          # phase: 0 = compute+stats, 1 = normalize
    n = pl.program_id(1)          # sample
    t = pl.program_id(2)          # spatial tile

    @pl.when(p == 0)
    def _compute_and_stats():
        @pl.when((n == 0) & (t == 0))
        def _init():
            stats_vmem[...] = jnp.zeros_like(stats_vmem)

        # 1x1 conv over a tiny channel count: unrolled VPU multiply-add loop.
        acc = x_ref[0] * w_ref[0]
        for c in range(1, n_chan):
            acc = acc + x_ref[c] * w_ref[c]
        y = jnp.maximum(acc, 0.0)                       # ReLU, (BR, 128) f32

        # Park the activation in the resident VMEM scratch (never hits HBM).
        y_vmem[n, t, :, :] = y

        # Per-lane partial sums over the sublane axis (XLU reduce); two
        # row-slice accumulations instead of a concatenate + full-block RMW.
        stats_vmem[0:1, :] = stats_vmem[0:1, :] + jnp.sum(y, axis=0, keepdims=True)
        stats_vmem[1:2, :] = stats_vmem[1:2, :] + jnp.sum(y * y, axis=0, keepdims=True)

        @pl.when((n == n_batch - 1) & (t == n_hw - 1))
        def _finalize():
            total = jnp.sum(stats_vmem[0:1, :], axis=1, keepdims=True)      # (1,1)
            total_sq = jnp.sum(stats_vmem[1:2, :], axis=1, keepdims=True)   # (1,1)
            mean = total * inv_count
            # TODO(synk): E[y^2]-E[y]^2 can cancel when mean^2 >> var; fine in f32.
            var = jnp.maximum(total_sq * inv_count - mean * mean, 0.0)
            scale = gb_ref[0] * jax.lax.rsqrt(var + eps)                    # gamma
            shift = gb_ref[1] - mean * scale                                # beta
            ss_vmem[0:1, :] = jnp.broadcast_to(scale, (1, LANE))
            ss_vmem[1:2, :] = jnp.broadcast_to(shift, (1, LANE))

    @pl.when(p == 1)
    def _apply():
        ss = ss_vmem[...]                                                   # (2,128)
        o_ref[...] = y_vmem[n, t, :, :] * ss[0:1, :] + ss[1:2, :]


# ----------------------------------------------------------------------------
# Two-pass fallback kernels (large activations that do not fit in VMEM)
# ----------------------------------------------------------------------------
def _conv_relu_stats_kernel(w_ref, x_ref, y_ref, stats_ref, *, n_chan):
    t = pl.program_id(2)

    @pl.when(t == 0)
    def _init():
        stats_ref[...] = jnp.zeros_like(stats_ref)

    acc = x_ref[0] * w_ref[0]
    for c in range(1, n_chan):
        acc = acc + x_ref[c] * w_ref[c]
    y = jnp.maximum(acc, 0.0)                            # ReLU, (BR, 128) f32
    y_ref[...] = y

    stats_ref[0:1, :] = stats_ref[0:1, :] + jnp.sum(y, axis=0, keepdims=True)
    stats_ref[1:2, :] = stats_ref[1:2, :] + jnp.sum(y * y, axis=0, keepdims=True)


def _bn_apply_kernel(ss_ref, y_ref, o_ref):
    o_ref[...] = y_ref[...] * ss_ref[0] + ss_ref[1]


# ----------------------------------------------------------------------------
# Wrapper
# ----------------------------------------------------------------------------
@functools.partial(jax.jit,
                   static_argnames=("eps", "force_two_pass", "max_block_rows"))
def cvt2d_1c_forward(x_nchw, conv_w, gamma, beta, eps=1e-5,
                     force_two_pass=False, max_block_rows=None):
    """x_nchw: (N, C, H, W) f32; conv_w: (1, C, 1, 1) f32; returns (N, 1, H, W)."""
    N, C, H, W = x_nchw.shape
    HW = H * W
    P = N * HW                          # true element count of the BN channel
    R = -(-HW // LANE)                  # rows of 128 lanes per sample

    cap = _vmem_capacity_bytes()
    budget = cap * 3 // 5               # fused-path VMEM budget (v7x-safe)
    row_cap = max_block_rows if max_block_rows is not None else 4096

    w_vec = conv_w[:, :, 0, 0].reshape(C).astype(jnp.float32)   # (C,) SMEM scalars

    # ---- choose path & tiling ----------------------------------------------
    br_f, rpad_f = _block_rows(R, C, 4 << 20, min(row_cap, 2048))
    n_hw_f = rpad_f // br_f
    br_f_pad = -(-br_f // 8) * 8
    fused_fp = (N * n_hw_f * br_f_pad + 2 * C * br_f + 2 * br_f + 64) * _ROW_BYTES
    use_fused = (not force_two_pass) and (fused_fp <= budget)

    if use_fused:
        BR, R_pad = br_f, rpad_f
    else:
        BR, R_pad = _block_rows(R, C, 8 << 20, min(row_cap, 4096))
    n_hw = R_pad // BR
    HW_pad = R_pad * LANE

    # ---- free reshape (no transpose); zero-pad spatial tail only if ragged --
    # Zero padding contributes 0 to sum/sumsq after ReLU and the divisor uses
    # the true P, so the statistics stay exact.
    x3 = x_nchw.reshape(N, C, HW).astype(jnp.float32)
    if HW_pad != HW:
        # TODO(synk): this materializes a padded copy of x in HBM; an in-kernel
        # tail mask (iota >= HW) would avoid ~2*C*N*HW*4 B of extra traffic.
        x3 = jnp.pad(x3, ((0, 0), (0, 0), (0, HW_pad - HW)))
    x4 = x3.reshape(N, C, R_pad, LANE)

    if use_fused:
        # -------------------- fused single-pass path -------------------------
        gb = jnp.stack([jnp.asarray(gamma, jnp.float32),
                        jnp.asarray(beta, jnp.float32)])
        kernel = functools.partial(
            _fused_kernel, n_chan=C, n_batch=N, n_hw=n_hw,
            inv_count=float(1.0 / P), eps=float(eps))
        out4 = pl.pallas_call(
            kernel,
            out_shape=jax.ShapeDtypeStruct((N, R_pad, LANE), jnp.float32),
            grid=(2, N, n_hw),
            in_specs=[
                pl.BlockSpec(memory_space=pltpu.SMEM),                 # conv weights
                pl.BlockSpec(memory_space=pltpu.SMEM),                 # gamma / beta
                pl.BlockSpec((None, C, BR, LANE),
                             lambda p, n, t: (n * (1 - p), 0, t * (1 - p), 0)),
            ],
            out_specs=pl.BlockSpec((None, BR, LANE),
                                   lambda p, n, t: (n * p, t * p, 0)),
            scratch_shapes=[
                pltpu.VMEM((N, n_hw, BR, LANE), jnp.float32),          # resident y
                pltpu.VMEM((2, LANE), jnp.float32),                    # sum / sumsq
                pltpu.VMEM((2, LANE), jnp.float32),                    # scale / shift
            ],
            compiler_params=pltpu.CompilerParams(
                dimension_semantics=("arbitrary", "arbitrary", "arbitrary"),
                vmem_limit_bytes=_vmem_limit(fused_fp, cap)),
        )(w_vec, gb, x4)

    else:
        # -------------------- two-pass streaming fallback --------------------
        n_split = 2 if (n_hw >= 2 and n_hw % 2 == 0) else 1   # v7x megacore split
        n_hw_s = n_hw // n_split
        blk_fp = (2 * (C + 1) * BR + 4 * n_split + 64) * _ROW_BYTES
        vlim = _vmem_limit(blk_fp, cap)

        kernel1 = functools.partial(_conv_relu_stats_kernel, n_chan=C)
        y4, stats = pl.pallas_call(
            kernel1,
            out_shape=(
                jax.ShapeDtypeStruct((N, R_pad, LANE), jnp.float32),
                jax.ShapeDtypeStruct((N, n_split, 2, LANE), jnp.float32),
            ),
            grid=(N, n_split, n_hw_s),
            in_specs=[
                pl.BlockSpec(memory_space=pltpu.SMEM),                 # conv weights
                pl.BlockSpec((None, C, BR, LANE),
                             lambda n, s, t: (n, 0, s * n_hw_s + t, 0)),
            ],
            out_specs=(
                pl.BlockSpec((None, BR, LANE),
                             lambda n, s, t: (n, s * n_hw_s + t, 0)),
                pl.BlockSpec((None, None, 2, LANE),
                             lambda n, s, t: (n, s, 0, 0)),
            ),
            compiler_params=pltpu.CompilerParams(
                dimension_semantics=("parallel", "parallel", "arbitrary"),
                vmem_limit_bytes=vlim),
        )(w_vec, x4)

        # tiny scalar BN finalize (training-mode batch statistics)
        total = jnp.sum(stats[:, :, 0, :])
        total_sq = jnp.sum(stats[:, :, 1, :])
        mean = total / P
        # TODO(synk): E[y^2]-E[y]^2 can cancel when mean^2 >> var; fine in f32 here.
        var = jnp.maximum(total_sq / P - mean * mean, 0.0)
        scale = gamma / jnp.sqrt(var + eps)
        shift = beta - mean * scale
        scale_shift = jnp.stack([scale, shift]).astype(jnp.float32)    # (2,)

        out4 = pl.pallas_call(
            _bn_apply_kernel,
            out_shape=jax.ShapeDtypeStruct((N, R_pad, LANE), jnp.float32),
            grid=(N, n_split, n_hw_s),
            in_specs=[
                pl.BlockSpec(memory_space=pltpu.SMEM),                 # scale/shift
                pl.BlockSpec((None, BR, LANE),
                             lambda n, s, t: (n, s * n_hw_s + t, 0)),
            ],
            out_specs=pl.BlockSpec((None, BR, LANE),
                                   lambda n, s, t: (n, s * n_hw_s + t, 0)),
            input_output_aliases={1: 0},                               # donate y4
            compiler_params=pltpu.CompilerParams(
                dimension_semantics=("parallel", "parallel", "parallel"),
                vmem_limit_bytes=vlim),
        )(scale_shift, y4)

    # ---- free reshapes back to NCHW (N, 1, H, W) -----------------------------
    return out4.reshape(N, HW_pad)[:, :HW].reshape(N, 1, H, W)


# ----------------------------------------------------------------------------
# Pure-JAX reference (mirrors the PyTorch module in training mode).
# ----------------------------------------------------------------------------
def reference_forward(x_nchw, conv_w, gamma, beta, eps=1e-5):
    y = jnp.einsum("nchw,oc->nohw", x_nchw, conv_w[:, :, 0, 0])  # 1x1 conv, no bias
    y = jnp.maximum(y, 0.0)                                      # ReLU
    mean = jnp.mean(y)                                           # BN over (N,H,W)
    var = jnp.mean((y - mean) ** 2)                              # biased variance
    return gamma * (y - mean) / jnp.sqrt(var + eps) + beta


if __name__ == "__main__":
    key = jax.random.PRNGKey(0)
    k_x, k_w, k_x2, k_w2, k_x3, k_w3 = jax.random.split(key, 6)

    gamma = jnp.float32(1.0)   # BatchNorm2d default weight init
    beta = jnp.float32(0.0)    # BatchNorm2d default bias init

    # --- main case (module-consistent small shapes): fused single-pass path --
    N, C, H, W = 2, 4, 16, 16
    x = jax.random.normal(k_x, (N, C, H, W), dtype=jnp.float32)
    conv_w = jax.random.normal(k_w, (1, C, 1, 1), dtype=jnp.float32) * 0.5

    out = jax.block_until_ready(cvt2d_1c_forward(x, conv_w, gamma, beta))
    ref = reference_forward(x, conv_w, gamma, beta)
    assert out.shape == (N, 1, H, W), out.shape
    np.testing.assert_allclose(np.asarray(out), np.asarray(ref), rtol=1e-4, atol=1e-4)

    # --- same case through the two-pass streaming fallback --------------------
    out_tp = jax.block_until_ready(
        cvt2d_1c_forward(x, conv_w, gamma, beta, force_two_pass=True))
    np.testing.assert_allclose(np.asarray(out_tp), np.asarray(ref), rtol=1e-4, atol=1e-4)

    # --- multi-tile grids (fused + split two-pass) via a reduced row cap ------
    N2, C2, H2, W2 = 1, 3, 32, 64
    x2 = jax.random.normal(k_x2, (N2, C2, H2, W2), dtype=jnp.float32)
    w2 = jax.random.normal(k_w2, (1, C2, 1, 1), dtype=jnp.float32) * 0.5
    ref2 = reference_forward(x2, w2, gamma, beta)
    o2a = jax.block_until_ready(
        cvt2d_1c_forward(x2, w2, gamma, beta, max_block_rows=8))
    np.testing.assert_allclose(np.asarray(o2a), np.asarray(ref2), rtol=1e-4, atol=1e-4)
    o2b = jax.block_until_ready(
        cvt2d_1c_forward(x2, w2, gamma, beta, force_two_pass=True, max_block_rows=8))
    np.testing.assert_allclose(np.asarray(o2b), np.asarray(ref2), rtol=1e-4, atol=1e-4)

    # --- ragged spatial size (H*W not a multiple of 128) -----------------------
    N3, C3, H3, W3 = 2, 4, 10, 10
    x3 = jax.random.normal(k_x3, (N3, C3, H3, W3), dtype=jnp.float32)
    w3 = jax.random.normal(k_w3, (1, C3, 1, 1), dtype=jnp.float32) * 0.5
    ref3 = reference_forward(x3, w3, gamma, beta)
    o3 = jax.block_until_ready(cvt2d_1c_forward(x3, w3, gamma, beta))
    np.testing.assert_allclose(np.asarray(o3), np.asarray(ref3), rtol=1e-4, atol=1e-4)

    print("KERNEL_OK")
</pallas_src>

<mosaic_0001>
module attributes {stable_mosaic.version = 11 : i64} {
  func.func @_fused_kernel(%arg0: i32, %arg1: i32, %arg2: i32, %arg3: memref<4xf32, #tpu.memory_space<smem>>, %arg4: memref<2xf32, #tpu.memory_space<smem>>, %arg5: memref<1x4x2x128xf32, #tpu.memory_space<vmem>>, %arg6: memref<1x2x128xf32, #tpu.memory_space<vmem>>, %arg7: memref<2x1x2x128xf32, #tpu.memory_space<vmem>>, %arg8: memref<2x128xf32, #tpu.memory_space<vmem>>, %arg9: memref<2x128xf32, #tpu.memory_space<vmem>>) attributes {dimension_semantics = [#tpu.dimension_semantics<arbitrary>, #tpu.dimension_semantics<arbitrary>, #tpu.dimension_semantics<arbitrary>], iteration_bounds = array<i64: 2, 2, 1>, scalar_prefetch = 0 : i64, scratch_operands = 3 : i64, tpu.core_type = #tpu.core_type<tc>, window_params = [{transform_indices = @transform_0, window_bounds = array<i64: 4>}, {transform_indices = @transform_1, window_bounds = array<i64: 2>}, {transform_indices = @transform_2, window_bounds = array<i64: 1, 4, 2, 128>}, {transform_indices = @transform_3, window_bounds = array<i64: 1, 2, 128>}]} {
    %c0_i32 = arith.constant 0 : i32
    %0 = arith.cmpi eq, %arg0, %c0_i32 : i32
    %1 = arith.extui %0 : i1 to i32
    %c0_i32_0 = arith.constant 0 : i32
    %2 = arith.cmpi ne, %1, %c0_i32_0 : i32
    scf.if %2 {
      %c0_i32_2 = arith.constant 0 : i32
      %6 = arith.cmpi eq, %arg1, %c0_i32_2 : i32
      %c0_i32_3 = arith.constant 0 : i32
      %7 = arith.cmpi eq, %arg2, %c0_i32_3 : i32
      %8 = arith.andi %6, %7 : i1
      %9 = arith.extui %8 : i1 to i32
      %c0_i32_4 = arith.constant 0 : i32
      %10 = arith.cmpi ne, %9, %c0_i32_4 : i32
      scf.if %10 {
        %cst_36 = arith.constant 0.000000e+00 : f32
        %57 = vector.broadcast %cst_36 : f32 to vector<2x128xf32>
        %c0_37 = arith.constant 0 : index
        %c0_38 = arith.constant 0 : index
        %58 = vector.load %arg8[%c0_37, %c0_38] : memref<2x128xf32, #tpu.memory_space<vmem>>, vector<2x128xf32>
        tpu.vector_store %arg8[%c0_37, %c0_38], %57 {strides = array<i32>} : memref<2x128xf32, #tpu.memory_space<vmem>>, vector<2x128xf32>,
      } else {
      }
      %c0 = arith.constant 0 : index
      %c0_5 = arith.constant 0 : index
      %c0_6 = arith.constant 0 : index
      %c0_7 = arith.constant 0 : index
      %11 = vector.load %arg5[%c0, %c0_5, %c0_6, %c0_7] : memref<1x4x2x128xf32, #tpu.memory_space<vmem>>, vector<1x1x2x128xf32>
      %12 = vector.shape_cast %11 : vector<1x1x2x128xf32> to vector<2x128xf32>
      %c0_8 = arith.constant 0 : index
      %13 = memref.load %arg3[%c0_8] : memref<4xf32, #tpu.memory_space<smem>>
      %14 = vector.broadcast %13 : f32 to vector<2x128xf32>
      %15 = arith.mulf %12, %14 : vector<2x128xf32>
      %c0_9 = arith.constant 0 : index
      %c1 = arith.constant 1 : index
      %c0_10 = arith.constant 0 : index
      %c0_11 = arith.constant 0 : index
      %16 = vector.load %arg5[%c0_9, %c1, %c0_10, %c0_11] : memref<1x4x2x128xf32, #tpu.memory_space<vmem>>, vector<1x1x2x128xf32>
      %17 = vector.shape_cast %16 : vector<1x1x2x128xf32> to vector<2x128xf32>
      %c1_12 = arith.constant 1 : index
      %18 = memref.load %arg3[%c1_12] : memref<4xf32, #tpu.memory_space<smem>>
      %19 = vector.broadcast %18 : f32 to vector<2x128xf32>
      %20 = arith.mulf %17, %19 : vector<2x128xf32>
      %21 = arith.addf %15, %20 : vector<2x128xf32>
      %c0_13 = arith.constant 0 : index
      %c2 = arith.constant 2 : index
      %c0_14 = arith.constant 0 : index
      %c0_15 = arith.constant 0 : index
      %22 = vector.load %arg5[%c0_13, %c2, %c0_14, %c0_15] : memref<1x4x2x128xf32, #tpu.memory_space<vmem>>, vector<1x1x2x128xf32>
      %23 = vector.shape_cast %22 : vector<1x1x2x128xf32> to vector<2x128xf32>
      %c2_16 = arith.constant 2 : index
      %24 = memref.load %arg3[%c2_16] : memref<4xf32, #tpu.memory_space<smem>>
      %25 = vector.broadcast %24 : f32 to vector<2x128xf32>
      %26 = arith.mulf %23, %25 : vector<2x128xf32>
      %27 = arith.addf %21, %26 : vector<2x128xf32>
      %c0_17 = arith.constant 0 : index
      %c3 = arith.constant 3 : index
      %c0_18 = arith.constant 0 : index
      %c0_19 = arith.constant 0 : index
      %28 = vector.load %arg5[%c0_17, %c3, %c0_18, %c0_19] : memref<1x4x2x128xf32, #tpu.memory_space<vmem>>, vector<1x1x2x128xf32>
      %29 = vector.shape_cast %28 : vector<1x1x2x128xf32> to vector<2x128xf32>
      %c3_20 = arith.constant 3 : index
      %30 = memref.load %arg3[%c3_20] : memref<4xf32, #tpu.memory_space<smem>>
      %31 = vector.broadcast %30 : f32 to vector<2x128xf32>
      %32 = arith.mulf %29, %31 : vector<2x128xf32>
      %33 = arith.addf %27, %32 : vector<2x128xf32>
      %cst = arith.constant 0.000000e+00 : f32
      %34 = vector.broadcast %cst : f32 to vector<2x128xf32>
      %35 = arith.maximumf %33, %34 : vector<2x128xf32>
      %36 = arith.index_cast %arg1 : i32 to index
      %37 = arith.index_cast %arg2 : i32 to index
      %c0_21 = arith.constant 0 : index
      %c0_22 = arith.constant 0 : index
      %38 = vector.load %arg7[%36, %37, %c0_21, %c0_22] : memref<2x1x2x128xf32, #tpu.memory_space<vmem>>, vector<1x1x2x128xf32>
      %39 = vector.shape_cast %38 : vector<1x1x2x128xf32> to vector<2x128xf32>
      %40 = vector.shape_cast %35 : vector<2x128xf32> to vector<1x1x2x128xf32>
      tpu.vector_store %arg7[%36, %37, %c0_21, %c0_22], %40 {strides = array<i32>} : memref<2x1x2x128xf32, #tpu.memory_space<vmem>>, vector<1x1x2x128xf32>,
      %c0_23 = arith.constant 0 : index
      %c0_24 = arith.constant 0 : index
      %41 = vector.load %arg8[%c0_23, %c0_24] : memref<2x128xf32, #tpu.memory_space<vmem>>, vector<1x128xf32>
      %cst_25 = arith.constant dense<0.000000e+00> : vector<128xf32>
      %42 = vector.multi_reduction <add>, %35, %cst_25 [0] : vector<2x128xf32> to vector<128xf32>
      %43 = vector.shape_cast %42 : vector<128xf32> to vector<1x128xf32>
      %44 = arith.addf %41, %43 : vector<1x128xf32>
      %c0_26 = arith.constant 0 : index
      %c0_27 = arith.constant 0 : index
      %45 = vector.load %arg8[%c0_26, %c0_27] : memref<2x128xf32, #tpu.memory_space<vmem>>, vector<1x128xf32>
      tpu.vector_store %arg8[%c0_26, %c0_27], %44 {strides = array<i32>} : memref<2x128xf32, #tpu.memory_space<vmem>>, vector<1x128xf32>,
      %c1_28 = arith.constant 1 : index
      %c0_29 = arith.constant 0 : index
      %46 = vector.load %arg8[%c1_28, %c0_29] : memref<2x128xf32, #tpu.memory_space<vmem>>, vector<1x128xf32>
      %47 = arith.mulf %35, %35 : vector<2x128xf32>
      %cst_30 = arith.constant dense<0.000000e+00> : vector<128xf32>
      %48 = vector.multi_reduction <add>, %47, %cst_30 [0] : vector<2x128xf32> to vector<128xf32>
      %49 = vector.shape_cast %48 : vector<128xf32> to vector<1x128xf32>
      %50 = arith.addf %46, %49 : vector<1x128xf32>
      %c1_31 = arith.constant 1 : index
      %c0_32 = arith.constant 0 : index
      %51 = vector.load %arg8[%c1_31, %c0_32] : memref<2x128xf32, #tpu.memory_space<vmem>>, vector<1x128xf32>
      tpu.vector_store %arg8[%c1_31, %c0_32], %50 {strides = array<i32>} : memref<2x128xf32, #tpu.memory_space<vmem>>, vector<1x128xf32>,
      %c1_i32_33 = arith.constant 1 : i32
      %52 = arith.cmpi eq, %arg1, %c1_i32_33 : i32
      %c0_i32_34 = arith.constant 0 : i32
      %53 = arith.cmpi eq, %arg2, %c0_i32_34 : i32
      %54 = arith.andi %52, %53 : i1
      %55 = arith.extui %54 : i1 to i32
      %c0_i32_35 = arith.constant 0 : i32
      %56 = arith.cmpi ne, %55, %c0_i32_35 : i32
      scf.if %56 {
        %c0_36 = arith.constant 0 : index
        %c0_37 = arith.constant 0 : index
        %57 = vector.load %arg8[%c0_36, %c0_37] : memref<2x128xf32, #tpu.memory_space<vmem>>, vector<1x128xf32>
        %cst_38 = arith.constant dense<0.000000e+00> : vector<1xf32>
        %58 = vector.multi_reduction <add>, %57, %cst_38 [1] : vector<1x128xf32> to vector<1xf32>
        %59 = vector.shape_cast %58 : vector<1xf32> to vector<1x1xf32>
        %c1_39 = arith.constant 1 : index
        %c0_40 = arith.constant 0 : index
        %60 = vector.load %arg8[%c1_39, %c0_40] : memref<2x128xf32, #tpu.memory_space<vmem>>, vector<1x128xf32>
        %cst_41 = arith.constant dense<0.000000e+00> : vector<1xf32>
        %61 = vector.multi_reduction <add>, %60, %cst_41 [1] : vector<1x128xf32> to vector<1xf32>
        %62 = vector.shape_cast %61 : vector<1xf32> to vector<1x1xf32>
        %cst_42 = arith.constant 0.001953125 : f32
        %63 = vector.broadcast %cst_42 : f32 to vector<1x1xf32>
        %64 = arith.mulf %59, %63 : vector<1x1xf32>
        %cst_43 = arith.constant 0.001953125 : f32
        %65 = vector.broadcast %cst_43 : f32 to vector<1x1xf32>
        %66 = arith.mulf %62, %65 : vector<1x1xf32>
        %67 = arith.mulf %64, %64 : vector<1x1xf32>
        %68 = arith.subf %66, %67 : vector<1x1xf32>
        %cst_44 = arith.constant 0.000000e+00 : f32
        %69 = vector.broadcast %cst_44 : f32 to vector<1x1xf32>
        %70 = arith.maximumf %68, %69 : vector<1x1xf32>
        %c0_45 = arith.constant 0 : index
        %71 = memref.load %arg4[%c0_45] : memref<2xf32, #tpu.memory_space<smem>>
        %cst_46 = arith.constant 9.99999974E-6 : f32
        %72 = vector.broadcast %cst_46 : f32 to vector<1x1xf32>
        %73 = arith.addf %70, %72 : vector<1x1xf32>
        %74 = math.rsqrt %73 : vector<1x1xf32>
        %75 = vector.broadcast %71 : f32 to vector<1x1xf32>
        %76 = arith.mulf %75, %74 : vector<1x1xf32>
        %c1_47 = arith.constant 1 : index
        %77 = memref.load %arg4[%c1_47] : memref<2xf32, #tpu.memory_space<smem>>
        %78 = arith.mulf %64, %76 : vector<1x1xf32>
        %79 = vector.broadcast %77 : f32 to vector<1x1xf32>
        %80 = arith.subf %79, %78 : vector<1x1xf32>
        %81 = vector.shape_cast %76 : vector<1x1xf32> to vector<1x1xf32>
        %82 = vector.broadcast %81 : vector<1x1xf32> to vector<1x128xf32>
        %c0_48 = arith.constant 0 : index
        %c0_49 = arith.constant 0 : index
        %83 = vector.load %arg9[%c0_48, %c0_49] : memref<2x128xf32, #tpu.memory_space<vmem>>, vector<1x128xf32>
        tpu.vector_store %arg9[%c0_48, %c0_49], %82 {strides = array<i32>} : memref<2x128xf32, #tpu.memory_space<vmem>>, vector<1x128xf32>,
        %84 = vector.shape_cast %80 : vector<1x1xf32> to vector<1x1xf32>
        %85 = vector.broadcast %84 : vector<1x1xf32> to vector<1x128xf32>
        %c1_50 = arith.constant 1 : index
        %c0_51 = arith.constant 0 : index
        %86 = vector.load %arg9[%c1_50, %c0_51] : memref<2x128xf32, #tpu.memory_space<vmem>>, vector<1x128xf32>
        tpu.vector_store %arg9[%c1_50, %c0_51], %85 {strides = array<i32>} : memref<2x128xf32, #tpu.memory_space<vmem>>, vector<1x128xf32>,
      } else {
      }
    } else {
    }
    %c1_i32 = arith.constant 1 : i32
    %3 = arith.cmpi eq, %arg0, %c1_i32 : i32
    %4 = arith.extui %3 : i1 to i32
    %c0_i32_1 = arith.constant 0 : i32
    %5 = arith.cmpi ne, %4, %c0_i32_1 : i32
    scf.if %5 {
      %c0 = arith.constant 0 : index
      %c0_2 = arith.constant 0 : index
      %6 = vector.load %arg9[%c0, %c0_2] : memref<2x128xf32, #tpu.memory_space<vmem>>, vector<2x128xf32>
      %7 = arith.index_cast %arg1 : i32 to index
      %8 = arith.index_cast %arg2 : i32 to index
      %c0_3 = arith.constant 0 : index
      %c0_4 = arith.constant 0 : index
      %9 = vector.load %arg7[%7, %8, %c0_3, %c0_4] : memref<2x1x2x128xf32, #tpu.memory_space<vmem>>, vector<1x1x2x128xf32>
      %10 = vector.shape_cast %9 : vector<1x1x2x128xf32> to vector<2x128xf32>
      %11 = vector.extract_strided_slice %6 {offsets = [0, 0], sizes = [1, 128], strides = [1, 1]} : vector<2x128xf32> to vector<1x128xf32>
      %12 = vector.broadcast %11 : vector<1x128xf32> to vector<2x128xf32>
      %13 = arith.mulf %10, %12 : vector<2x128xf32>
      %14 = vector.extract_strided_slice %6 {offsets = [1, 0], sizes = [1, 128], strides = [1, 1]} : vector<2x128xf32> to vector<1x128xf32>
      %15 = vector.broadcast %14 : vector<1x128xf32> to vector<2x128xf32>
      %16 = arith.addf %13, %15 : vector<2x128xf32>
      %c0_5 = arith.constant 0 : index
      %c0_6 = arith.constant 0 : index
      %c0_7 = arith.constant 0 : index
      %17 = vector.load %arg6[%c0_5, %c0_6, %c0_7] : memref<1x2x128xf32, #tpu.memory_space<vmem>>, vector<1x2x128xf32>
      %18 = vector.shape_cast %17 : vector<1x2x128xf32> to vector<2x128xf32>
      %19 = vector.shape_cast %16 : vector<2x128xf32> to vector<1x2x128xf32>
      tpu.vector_store %arg6[%c0_5, %c0_6, %c0_7], %19 {strides = array<i32>} : memref<1x2x128xf32, #tpu.memory_space<vmem>>, vector<1x2x128xf32>,
    } else {
    }
    return
  }
  func.func @transform_0(%arg0: i32, %arg1: i32, %arg2: i32) -> i32 {
    %c0_i32 = arith.constant 0 : i32
    %c0_i32_0 = arith.constant 0 : i32
    return %c0_i32 : i32
  }
  func.func @transform_1(%arg0: i32, %arg1: i32, %arg2: i32) -> i32 {
    %c0_i32 = arith.constant 0 : i32
    %c0_i32_0 = arith.constant 0 : i32
    return %c0_i32 : i32
  }
  func.func @transform_2(%arg0: i32, %arg1: i32, %arg2: i32) -> (i32, i32, i32, i32) {
    %c1_i32 = arith.constant 1 : i32
    %0 = arith.subi %c1_i32, %arg0 : i32
    %1 = arith.muli %arg1, %0 : i32
    %c1_i32_0 = arith.constant 1 : i32
    %2 = arith.subi %c1_i32_0, %arg0 : i32
    %3 = arith.muli %arg2, %2 : i32
    %c0_i32 = arith.constant 0 : i32
    %c0_i32_1 = arith.constant 0 : i32
    %c0_i32_2 = arith.constant 0 : i32
    return %1, %c0_i32, %3, %c0_i32_1 : i32, i32, i32, i32
  }
  func.func @transform_3(%arg0: i32, %arg1: i32, %arg2: i32) -> (i32, i32, i32) {
    %0 = arith.muli %arg1, %arg0 : i32
    %1 = arith.muli %arg2, %arg0 : i32
    %c0_i32 = arith.constant 0 : i32
    %c0_i32_0 = arith.constant 0 : i32
    return %0, %1, %c0_i32 : i32, i32, i32
  }
}

</mosaic_0001>

<llo_original>
// kernel: cvt2d_1c_forward.1
$region0: #{cvt2d_1c_forward.1}
  #allocation0 [shape = 'u32[]', space=smem, size = 0x4, offset = 0x4, fixed_abs, tag = 'smem constant byte address 0x4 - core index']
  #allocation1 [shape = 'u32[144,128]{1,0:T(1,128)}', space=vmem, size = 0x12000, scoped, tag = 'internal scratch']
  #allocation2 [shape = 'f32[2,1,2,128]{3,2,1,0:T(2,128)}', space=vmem, size = 0x800, scoped, tag = 'scratch operand']
  #allocation3 [shape = 'f32[2,128]{1,0:T(2,128)}', space=vmem, size = 0x400, scoped, tag = 'scratch operand']
  #allocation4 [shape = 'f32[2,128]{1,0:T(2,128)}', space=vmem, size = 0x400, scoped, tag = 'scratch operand']
  %s0 = inlined_call_operand.vmem [shape: f32[4], index: 0, kind: input, shape index: {}]
  %s1 = inlined_call_operand.vmem [shape: f32[2], index: 1, kind: input, shape index: {}]
  %s2 = inlined_call_operand.vmem [shape: f32[2,4,2,128], index: 2, kind: input, shape index: {}]
  %s3 = inlined_call_operand.vmem [shape: f32[2,2,128], index: 3, kind: output, shape index: {}]
  %s4 = sld [smem:[#allocation0]]
  $region69: #{cvt2d_1c_forward.1} parent=0
    _
  %s6 = ssub.s32 1, %s4
  %s7 = scalar_select 0, %s6, %s4
  $region1: #{cvt2d_1c_forward.1} parent=0
    #allocation5 [shape = 'u8[512]{0}', space=smem, size = 0x200, scoped, tag = 'input window, operand 0, single buffered']
    #allocation6 [shape = 's32[2]{0}', space=sflag, size = 0x8, scoped, tag = 'scoped memory for cvt2d_1c_forward.1']
    #allocation7 [shape = 'u8[512]{0}', space=smem, size = 0x200, scoped, tag = 'input window, operand 1, single buffered']
    #allocation8 [shape = 's32[1]{0}', space=sflag, size = 0x4, scoped, tag = 'scoped memory for cvt2d_1c_forward.1']
    %8 = vsyncpa [#allocation6], 0
    %9 = vsyncpa [#allocation8], 0
    loop: start=0, step=1, limit=6
    $region2: #{cvt2d_1c_forward.1} parent=1 // loop_pre_header
      _
    $region3: #{cvt2d_1c_forward.1} parent=1 // loop_header
      %s11 = sphi 0, %s15
      %p12 = scmp.ge.s32.totalorder %s11, 6
      %s18 = sphi 0, %s37
      %s19 = sphi 0, %s33
      %s20 = sphi 0, %s29
      %s21 = sphi 0, %s18
      %s22 = sphi 0, %s19
      %s23 = sphi 0, %s20
      %s24 = sphi 0, %s21
      %s25 = sphi 0, %s22
      %s26 = sphi 0, %s23
      %s38 = sphi 0, %s38
      %s40 = sphi 0, %s38
      %s41 = sphi 0, %s40
      %s55 = sphi 0, %s41
      %s59 = sphi 0, %s59
      %s61 = sphi 0, %s59
      %s62 = sphi 0, %s61
      %s76 = sphi 0, %s62
      %s90 = sphi 0, %s92
      %s93 = sphi 0, %s90
      %s94 = sphi 0, %s93
      %s110 = sphi 0, %s94
      %s122 = sphi 0, %s124
      %s125 = sphi 0, %s122
      %s126 = sphi 0, %s125
      %s142 = sphi 0, %s126
    $region4: #{cvt2d_1c_forward.1} parent=1 // loop_header_branch
      %14 = sbr.rel (%p12) target = $region8
    $region5: #{cvt2d_1c_forward.1} parent=1 // loop_body
      %s16 = ssub.s32 %s11, 1
      %s17 = ssub.s32 %s11, 2
      %s27 = sadd.s32 1, %s20
      %p28 = scmp.ge.s32.totalorder %s27, 1
      %s29 = scalar_select %p28, 0, %s27
      %s30 = sadd.s32 1, %s19
      %s31 = scalar_select %p28, %s30, %s19
      %p32 = scmp.ge.s32.totalorder %s31, 2
      %s33 = scalar_select %p32, 0, %s31
      %s34 = sadd.s32 1, %s18
      %s35 = scalar_select %p32, %s34, %s18
      %p36 = scmp.ge.s32.totalorder %s35, 2
      %s37 = scalar_select %p36, 0, %s35
      %s39 = sadd.s32 %s38, 1
      %p42 = scmp.eq.s32.totalorder %s11, 3
      %p43 = scmp.ne.s32.totalorder %s38, %s40
      %p44 = scmp.eq.s32.totalorder %s11, 0
      %p45 = por %p43, %p44
      %p46 = scmp.ne.s32.totalorder %s38, %s40
      %p47 = scmp.eq.s32.totalorder %s16, 3
      %p48 = por %p46, %p47
      %p49 = scmp.ne.s32.totalorder %s40, %s41
      %p50 = scmp.eq.s32.totalorder %s16, 0
      %p51 = por %p49, %p50
      %p52 = scmp.ne.s32.totalorder %s40, %s41
      %p53 = scmp.eq.s32.totalorder %s17, 3
      %p54 = por %p52, %p53
      %p56 = scmp.ne.s32.totalorder %s41, %s55
      %p57 = scmp.eq.s32.totalorder %s17, 0
      %p58 = por %p56, %p57
      %s60 = sadd.s32 %s59, 1
      %p63 = scmp.eq.s32.totalorder %s11, 3
      %p64 = scmp.ne.s32.totalorder %s59, %s61
      %p65 = scmp.eq.s32.totalorder %s11, 0
      %p66 = por %p64, %p65
      %p67 = scmp.ne.s32.totalorder %s59, %s61
      %p68 = scmp.eq.s32.totalorder %s16, 3
      %p69 = por %p67, %p68
      %p70 = scmp.ne.s32.totalorder %s61, %s62
      %p71 = scmp.eq.s32.totalorder %s16, 0
      %p72 = por %p70, %p71
      %p73 = scmp.ne.s32.totalorder %s61, %s62
      %p74 = scmp.eq.s32.totalorder %s17, 3
      %p75 = por %p73, %p74
      %p77 = scmp.ne.s32.totalorder %s62, %s76
      %p78 = scmp.eq.s32.totalorder %s17, 0
      %p79 = por %p77, %p78
      %s80 = ssub.s32 1, %s18
      %s81 = smul.u32 %s19, %s80
      %s82 = smul.u32 %s20, %s80
      %s83 = ssub.s32 1, %s37
      %s84 = smul.u32 %s33, %s83
      %s85 = smul.u32 %s29, %s83
      %s86 = ssub.s32 %s81, %s84
      %s87 = ssub.s32 %s82, %s85
      %s88 = sor.u32 %s86, %s87
      %p89 = scmp.eq.s32.totalorder %s88, 0
      %s91 = sadd.s32 %s90, 1
      %s92 = scalar_select %p89, %s90, %s91
      %p95 = pneg %p89
      %p96 = scmp.eq.s32.totalorder %s11, 3
      %p97 = por %p95, %p96
      %p98 = scmp.ne.s32.totalorder %s90, %s93
      %p99 = scmp.eq.s32.totalorder %s11, 0
      %p100 = por %p98, %p99
      %p101 = scmp.ne.s32.totalorder %s90, %s93
      %p102 = scmp.eq.s32.totalorder %s16, 3
      %p103 = por %p101, %p102
      %p104 = scmp.ne.s32.totalorder %s93, %s94
      %p105 = scmp.eq.s32.totalorder %s16, 0
      %p106 = por %p104, %p105
      %p107 = scmp.ne.s32.totalorder %s93, %s94
      %p108 = scmp.eq.s32.totalorder %s17, 3
      %p109 = por %p107, %p108
      %p111 = scmp.ne.s32.totalorder %s94, %s110
      %p112 = scmp.eq.s32.totalorder %s17, 0
      %p113 = por %p111, %p112
      %s114 = smul.u32 %s19, %s18
      %s115 = smul.u32 %s20, %s18
      %s116 = smul.u32 %s33, %s37
      %s117 = smul.u32 %s29, %s37
      %s118 = ssub.s32 %s114, %s116
      %s119 = ssub.s32 %s115, %s117
      %s120 = sor.u32 %s118, %s119
      %p121 = scmp.eq.s32.totalorder %s120, 0
      %s123 = sadd.s32 %s122, 1
      %s124 = scalar_select %p121, %s122, %s123
      %p127 = pneg %p121
      %p128 = scmp.eq.s32.totalorder %s11, 3
      %p129 = por %p127, %p128
      %p130 = scmp.ne.s32.totalorder %s122, %s125
      %p131 = scmp.eq.s32.totalorder %s11, 0
      %p132 = por %p130, %p131
      %p133 = scmp.ne.s32.totalorder %s122, %s125
      %p134 = scmp.eq.s32.totalorder %s16, 3
      %p135 = por %p133, %p134
      %p136 = scmp.ne.s32.totalorder %s125, %s126
      %p137 = scmp.eq.s32.totalorder %s16, 0
      %p138 = por %p136, %p137
      %p139 = scmp.ne.s32.totalorder %s125, %s126
      %p140 = scmp.eq.s32.totalorder %s17, 3
      %p141 = por %p139, %p140
      %p143 = scmp.ne.s32.totalorder %s126, %s142
      %p144 = scmp.eq.s32.totalorder %s17, 0
      %p145 = por %p143, %p144
      %p146 = scmp.le.s32.totalorder 1, %s11
      %p147 = scmp.lt.s32.totalorder %s11, 5
      %p148 = pnand %p146, %p147
      %p149 = pneg %p148
      // Predicated region
      $region9: #{cvt2d_1c_forward.1} parent=5 // pred_check
        _
      $region10: #{cvt2d_1c_forward.1} parent=5 // pred_check_branch
        %151 = sbr.rel (%p148) target = $region12
      $region11: #{cvt2d_1c_forward.1} parent=5 // pred_region
        %s152 = ssub.s32 %s11, 1
        // Predicated region
        $region13: #{cvt2d_1c_forward.1} parent=11 // pred_check
          %p153 = pneg %p51
        $region14: #{cvt2d_1c_forward.1} parent=11 // pred_check_branch
          %155 = sbr.rel (%p153) target = $region16
        $region15: #{cvt2d_1c_forward.1} parent=11 // pred_region
          %s157 = ssub.s32 16, 16
          %158 = vsyncadd [#allocation6], %s157
          %s160 = sshll.u32 %s0, 4
          %s161 = int_to_ptr.vmem [resolvable:$true] %s160
          %163 = dma.vmem_to_smem %s161, 16, [#allocation5], [#allocation6]
        $region16: #{cvt2d_1c_forward.1} parent=11 // pred_fallthru
          _
        // Predicated region
        $region17: #{cvt2d_1c_forward.1} parent=11 // pred_check
          %p164 = pneg %p72
        $region18: #{cvt2d_1c_forward.1} parent=11 // pred_check_branch
          %166 = sbr.rel (%p164) target = $region20
        $region19: #{cvt2d_1c_forward.1} parent=11 // pred_region
          %s168 = ssub.s32 16, 16
          %169 = vsyncadd [#allocation8], %s168
          %s171 = sshll.u32 %s1, 4
          %s172 = int_to_ptr.vmem [resolvable:$true] %s171
          %174 = dma.vmem_to_smem %s172, 16, [#allocation7], [#allocation8]
        $region20: #{cvt2d_1c_forward.1} parent=11 // pred_fallthru
          _
      $region12: #{cvt2d_1c_forward.1} parent=5 // pred_fallthru
        _
      %p175 = scmp.lt.s32.totalorder %s11, 4
      // Predicated region
      $region21: #{cvt2d_1c_forward.1} parent=5 // pred_check
        %p176 = pneg %p175
      $region22: #{cvt2d_1c_forward.1} parent=5 // pred_check_branch
        %178 = sbr.rel (%p176) target = $region24
      $region23: #{cvt2d_1c_forward.1} parent=5 // pred_region
        // Predicated region
        $region25: #{cvt2d_1c_forward.1} parent=23 // pred_check
          %p179 = pneg %p100
        $region26: #{cvt2d_1c_forward.1} parent=23 // pred_check_branch
          %181 = sbr.rel (%p179) target = $region28
        $region27: #{cvt2d_1c_forward.1} parent=23 // pred_region
          %s182 = ssub.s32 1, %s18
          %s183 = smul.u32 %s19, %s182
          %s184 = smul.u32 %s20, %s182
          %p185 = scmp.lt.s32.totalorder %s183, 1
          %s186 = scalar_select %p185, %s183, 1
          %p187 = scmp.lt.s32.totalorder %s184, 0
          %s188 = scalar_select %p187, %s184, 0
          %s189 = smul.addr %s186, 4
          %s190 = sadd.s32 %s188, %s189
          %s191 = smul.addr %s190, 2
          %s192 = scalar_lea.vmem %s2, %s191
          %s193 = ssub.s32 1, %s18
          %s194 = smul.u32 %s19, %s193
          %s195 = smul.u32 %s20, %s193
        $region28: #{cvt2d_1c_forward.1} parent=23 // pred_fallthru
          _
      $region24: #{cvt2d_1c_forward.1} parent=5 // pred_fallthru
        _
      %p196 = scmp.le.s32.totalorder 1, %s11
      %p197 = scmp.lt.s32.totalorder %s11, 5
      %p198 = pnand %p196, %p197
      %p199 = pneg %p198
      // Predicated region
      $region29: #{cvt2d_1c_forward.1} parent=5 // pred_check
        _
      $region30: #{cvt2d_1c_forward.1} parent=5 // pred_check_branch
        %201 = sbr.rel (%p198) target = $region32
      $region31: #{cvt2d_1c_forward.1} parent=5 // pred_region
        %s202 = ssub.s32 %s11, 1
        // Predicated region
        $region33: #{cvt2d_1c_forward.1} parent=31 // pred_check
          %p203 = pneg %p51
        $region34: #{cvt2d_1c_forward.1} parent=31 // pred_check_branch
          %205 = sbr.rel (%p203) target = $region36
        $region35: #{cvt2d_1c_forward.1} parent=31 // pred_region
          %206 = dma.done [#allocation6], 16
        $region36: #{cvt2d_1c_forward.1} parent=31 // pred_fallthru
          _
        // Predicated region
        $region37: #{cvt2d_1c_forward.1} parent=31 // pred_check
          %p207 = pneg %p72
        $region38: #{cvt2d_1c_forward.1} parent=31 // pred_check_branch
          %209 = sbr.rel (%p207) target = $region40
        $region39: #{cvt2d_1c_forward.1} parent=31 // pred_region
          %210 = dma.done [#allocation8], 16
        $region40: #{cvt2d_1c_forward.1} parent=31 // pred_fallthru
          _
        %211 = sfence
        %p212 = pneg %p51
        %p213 = pneg %p48
        %p214 = pneg %p72
        %p215 = pneg %p69
        %s216 = ssub.s32 1, %s21
        %s217 = smul.u32 %s22, %s216
        %s218 = smul.u32 %s23, %s216
        %p219 = scmp.lt.s32.totalorder %s217, 1
        %s220 = scalar_select %p219, %s217, 1
        %p221 = scmp.lt.s32.totalorder %s218, 0
        %s222 = scalar_select %p221, %s218, 0
        %s223 = smul.addr %s220, 4
        %s224 = sadd.s32 %s222, %s223
        %s225 = smul.addr %s224, 2
        %s226 = scalar_lea.vmem %s2, %s225
        %p227 = pneg %p106
        %p228 = pneg %p103
        %p229 = pneg %p138
        %p230 = pneg %p135
        %s231 = smul.u32 %s22, %s21
        %s232 = smul.u32 %s23, %s21
        %p233 = scmp.lt.s32.totalorder %s231, 1
        %s234 = scalar_select %p233, %s231, 1
        %p235 = scmp.lt.s32.totalorder %s232, 0
        %s236 = scalar_select %p235, %s232, 0
        %s237 = sadd.s32 %s236, %s234
        %s238 = smul.addr %s237, 2
        %s239 = scalar_lea.vmem %s3, %s238
        %s240 = ssub.s32 1, %s21
        %s241 = smul.u32 %s22, %s240
        %s242 = smul.u32 %s23, %s240
        %p243 = scmp.lt.s32.totalorder %s241, 1
        %s244 = scalar_select %p243, %s241, 1
        %p245 = scmp.lt.s32.totalorder %s242, 0
        %s246 = scalar_select %p245, %s242, 0
        %s247 = smul.addr %s244, 4
        %s248 = sadd.s32 %s246, %s247
        %s249 = smul.addr %s248, 2
        %s250 = scalar_lea.vmem %s2, %s249
        %s251 = ssub.s32 1, %s21
        %s252 = smul.u32 %s22, %s251
        %s253 = smul.u32 %s23, %s251
        %s254 = smul.u32 %s22, %s21
        %s255 = smul.u32 %s23, %s21
        %p256 = scmp.lt.s32.totalorder %s254, 1
        %s257 = scalar_select %p256, %s254, 1
        %p258 = scmp.lt.s32.totalorder %s255, 0
        %s259 = scalar_select %p258, %s255, 0
        %s260 = sadd.s32 %s259, %s257
        %s261 = smul.addr %s260, 2
        %s262 = scalar_lea.vmem %s3, %s261
        %s263 = smul.u32 %s22, %s21
        %s264 = smul.u32 %s23, %s21
        %p265 = scmp.eq.s32.totalorder %s21, 0
        // Predicated region
        $region41: #{cvt2d_1c_forward.1} parent=31 // pred_check
          %p266 = pneg %p265
        $region42: #{cvt2d_1c_forward.1} parent=31 // pred_check_branch
          %268 = sbr.rel (%p266) target = $region44
        $region43: #{cvt2d_1c_forward.1} parent=31 // pred_region
          %p269 = scmp.eq.s32.totalorder %s22, 0
          %p270 = scmp.eq.s32.totalorder %s23, 0
          %p271 = pnand %p269, %p270
          %p272 = pneg %p271
          // Predicated region
          $region45: #{cvt2d_1c_forward.1} parent=43 // pred_check
            _
          $region46: #{cvt2d_1c_forward.1} parent=43 // pred_check_branch
            %274 = sbr.rel (%p271) target = $region48
          $region47: #{cvt2d_1c_forward.1} parent=43 // pred_region
            %275 = vst [vmem:[#allocation3] sm:$0x3] 0.0
          $region48: #{cvt2d_1c_forward.1} parent=43 // pred_fallthru
            _
          %v276 = vld [vmem:[%s250] sm:$0x3]
          %s277 = sld [smem:[#allocation5]]
          %v278 = vstv %s277
          %v279 = vmul.f32 %v276, %v278
          %s280 = scalar_lea.vmem %s250, 2
          %v281 = vld [vmem:[%s280] sm:$0x3]
          %s282 = sld [smem:[#allocation5 + $0x1]]
          %v283 = vstv %s282
          %v284 = vmul.f32 %v281, %v283
          %v285 = vadd.f32 %v279, %v284
          %s286 = scalar_lea.vmem %s250, 4
          %v287 = vld [vmem:[%s286] sm:$0x3]
          %s288 = sld [smem:[#allocation5 + $0x2]]
          %v289 = vstv %s288
          %v290 = vmul.f32 %v287, %v289
          %v291 = vadd.f32 %v285, %v290
          %s292 = scalar_lea.vmem %s250, 6
          %v293 = vld [vmem:[%s292] sm:$0x3]
          %s294 = sld [smem:[#allocation5 + $0x3]]
          %v295 = vstv %s294
          %v296 = vmul.f32 %v293, %v295
          %v297 = vadd.f32 %v291, %v296
          %v298 = vmax.f32 %v297, 0.0
          %s299 = smul.u32 %s23, 2
          %s300 = smul.u32 %s22, 2
          %s301 = sadd.s32 %s299, %s300
          %s302 = scalar_lea.vmem [#allocation2], %s301
          %303 = vst [vmem:[%s302] sm:$0x3] %v298
          %v304 = vld [vmem:[#allocation3] sm:$0x1]
          %vm305 = vcmask 1041408
          %v306 = vsel %vm305, %v298, 0.0
          %v307 = vrot.slane %v306, 4
          %v308 = vadd.f32 %v306, %v307
          %v309 = vrot.slane %v308, 2
          %v310 = vadd.f32 %v308, %v309
          %v311 = vrot.slane %v310, 1
          %v312 = vadd.f32 %v310, %v311
          %v313 = vadd.f32 %v304, %v312
          %314 = vst [vmem:[#allocation3] sm:$0x1] %v313
          %v315 = vld [vmem:[#allocation3 + $0x1] sm:$0x1]
          %v316 = vmul.f32 %v298, %v298
          %v317 = vsel %vm305, %v316, 0.0
          %v318 = vrot.slane %v317, 4
          %v319 = vadd.f32 %v317, %v318
          %v320 = vrot.slane %v319, 2
          %v321 = vadd.f32 %v319, %v320
          %v322 = vrot.slane %v321, 1
          %v323 = vadd.f32 %v321, %v322
          %v324 = vadd.f32 %v315, %v323
          %325 = vst [vmem:[#allocation3 + $0x1] sm:$0x1] %v324
          %p326 = scmp.eq.s32.totalorder %s22, 1
          %p327 = pnand %p326, %p270
          %p328 = pneg %p327
          // Predicated region
          $region49: #{cvt2d_1c_forward.1} parent=43 // pred_check
            _
          $region50: #{cvt2d_1c_forward.1} parent=43 // pred_check_branch
            %330 = sbr.rel (%p327) target = $region52
          $region51: #{cvt2d_1c_forward.1} parent=43 // pred_region
            %v331 = vld [vmem:[#allocation3] sm:$0x1]
            %vm332 = vcmask 1040384
            %v333 = vsel %vm332, %v331, 0.0
            %334 = vadd.xlane.f32.xlu0 %v333
            %v335 = vpop.xlane.xlu0 %334
            %v336 = vld [vmem:[#allocation3 + $0x1] sm:$0x1]
            %v337 = vsel %vm332, %v336, 0.0
            %338 = vadd.xlane.f32.xlu0 %v337
            %v339 = vpop.xlane.xlu0 %338
            %v340 = vmul.f32 %v335, 0.001953125
            %v341 = vmul.f32 %v339, 0.001953125
            %v342 = vmul.f32 %v340, %v340
            %v343 = vsub.f32 %v341, %v342
            %v344 = vmax.f32 %v343, 0.0
            %s345 = sld [smem:[#allocation7]]
            %v346 = vadd.f32 %v344, 1e-05
            %v347 = vrsqrt.pop %v346
            %v348 = vstv %s345
            %v349 = vmul.f32 %v348, %v347
            %s350 = sld [smem:[#allocation7 + $0x1]]
            %v351 = vmul.f32 %v340, %v349
            %v352 = vstv %s350
            %v353 = vsub.f32 %v352, %v351
            %354 = vst [vmem:[#allocation4] sm:$0x1] %v349
            %355 = vst [vmem:[#allocation4 + $0x1] sm:$0x1] %v353
          $region52: #{cvt2d_1c_forward.1} parent=43 // pred_fallthru
            _
        $region44: #{cvt2d_1c_forward.1} parent=31 // pred_fallthru
          _
        %p356 = scmp.eq.s32.totalorder %s21, 1
        // Predicated region
        $region53: #{cvt2d_1c_forward.1} parent=31 // pred_check
          %p357 = pneg %p356
        $region54: #{cvt2d_1c_forward.1} parent=31 // pred_check_branch
          %359 = sbr.rel (%p357) target = $region56
        $region55: #{cvt2d_1c_forward.1} parent=31 // pred_region
          %v360 = vld [vmem:[#allocation4] sm:$0x3]
          %s361 = smul.u32 %s23, 2
          %s362 = smul.u32 %s22, 2
          %s363 = sadd.s32 %s361, %s362
          %s364 = scalar_lea.vmem [#allocation2], %s363
          %v365 = vld [vmem:[%s364] sm:$0x3]
          %v366 = vlaneseq
          %v367 = vshrl.u32 %v366, 7
          %v368 = vsub.s32 0, %v367
          %v369 = vrot.slane %v360, %v368
          %v370 = vmul.f32 %v365, %v369
          %v371 = vlaneseq
          %v372 = vshrl.u32 %v371, 7
          %v373 = vsub.s32 1, %v372
          %v374 = vrot.slane %v360, %v373
          %v375 = vadd.f32 %v370, %v374
          %376 = vst [vmem:[%s262] sm:$0x3] %v375
        $region56: #{cvt2d_1c_forward.1} parent=31 // pred_fallthru
          _
        %s377 = smul.u32 %s22, %s21
        %s378 = smul.u32 %s23, %s21
        %p379 = scmp.lt.s32.totalorder %s377, 1
        %s380 = scalar_select %p379, %s377, 1
        %p381 = scmp.lt.s32.totalorder %s378, 0
        %s382 = scalar_select %p381, %s378, 0
        %s383 = sadd.s32 %s382, %s380
        %s384 = smul.addr %s383, 2
        %s385 = scalar_lea.vmem %s3, %s384
        // Predicated region
        $region57: #{cvt2d_1c_forward.1} parent=31 // pred_check
          %p386 = pneg %p135
        $region58: #{cvt2d_1c_forward.1} parent=31 // pred_check_branch
          %388 = sbr.rel (%p386) target = $region60
        $region59: #{cvt2d_1c_forward.1} parent=31 // pred_region
          %s389 = smul.u32 %s22, %s21
          %s390 = smul.u32 %s23, %s21
        $region60: #{cvt2d_1c_forward.1} parent=31 // pred_fallthru
          _
      $region32: #{cvt2d_1c_forward.1} parent=5 // pred_fallthru
        _
      %p391 = scmp.le.s32.totalorder 2, %s11
      // Predicated region
      $region61: #{cvt2d_1c_forward.1} parent=5 // pred_check
        %p392 = pneg %p391
      $region62: #{cvt2d_1c_forward.1} parent=5 // pred_check_branch
        %394 = sbr.rel (%p392) target = $region64
      $region63: #{cvt2d_1c_forward.1} parent=5 // pred_region
        %s395 = ssub.s32 %s11, 2
        // Predicated region
        $region65: #{cvt2d_1c_forward.1} parent=63 // pred_check
          %p396 = pneg %p141
        $region66: #{cvt2d_1c_forward.1} parent=63 // pred_check_branch
          %398 = sbr.rel (%p396) target = $region68
        $region67: #{cvt2d_1c_forward.1} parent=63 // pred_region
          %s399 = smul.u32 %s25, %s24
          %s400 = smul.u32 %s26, %s24
          %p401 = scmp.lt.s32.totalorder %s399, 1
          %s402 = scalar_select %p401, %s399, 1
          %p403 = scmp.lt.s32.totalorder %s400, 0
          %s404 = scalar_select %p403, %s400, 0
          %s405 = sadd.s32 %s404, %s402
          %s406 = smul.addr %s405, 2
          %s407 = scalar_lea.vmem %s3, %s406
        $region68: #{cvt2d_1c_forward.1} parent=63 // pred_fallthru
          _
      $region64: #{cvt2d_1c_forward.1} parent=5 // pred_fallthru
        _
    $region6: #{cvt2d_1c_forward.1} parent=1 // loop_footer
      %s15 = sadd.s32 1, %s11
    $region7: #{cvt2d_1c_forward.1} parent=1 // loop_footer_branch
      %10 = sbr.rel target = $region3
    $region8: #{cvt2d_1c_forward.1} parent=1 // loop_exit
      _
    %408 = vsyncpa [#allocation6], 1
    %s409 = scalar_lea.sflag [#allocation6], 1
    %410 = vsyncpa %s409, 1
    %411 = vsyncpa [#allocation8], 1

</llo_original>
